<compile_context>
chip_gen: v6e
topology: v6e:2x2x1
jax: 0.10.0
libtpu: 0.0.40
codegen_flags: <defaults>
</compile_context>

<pallas_src>
import functools

import jax
import jax.numpy as jnp
from jax.experimental import pallas as pl
from jax.experimental.pallas import tpu as pltpu


def _round_up(x, m):
    return (x + m - 1) // m * m


def _causal_conv1d_kernel(halo_ref, x_ref, w_ref, o_ref, *, K, dilation, pad):
    """One (batch, C_out-tile, L-tile) grid step.

    halo_ref: (1, 1, C_in, HALO)  causal left context for this L tile; only
                                  the last `pad` columns are ever read.
    x_ref:    (1, C_in, TL)       main tile (NCL layout).
    w_ref:    (TCO, K*C_in)       tap-stacked weights, tap-major.
    o_ref:    (1, TCO, TL)        output tile (lane-dense: TL % 128 == 0).
    """
    TL = o_ref.shape[2]
    HALO = halo_ref.shape[3]
    base = HALO - pad  # static

    # Load each ref exactly once; the K taps are slices of the loaded value
    # (no K overlapping VMEM re-reads).  The concat is lane-aligned because
    # HALO and TL are both multiples of 128.
    x_full = jnp.concatenate([halo_ref[0, 0], x_ref[0]], axis=1)  # (C_in, HALO+TL)

    # Fold the K dilated taps into the contraction dim: one wide MXU matmul
    # (contraction K*C_in) instead of K skinny ones.
    taps = [x_full[:, base + k * dilation: base + k * dilation + TL]
            for k in range(K)]                                      # K x (C_in, TL)
    x_stack = jnp.concatenate(taps, axis=0) if K > 1 else taps[0]   # (K*C_in, TL)

    acc = jnp.dot(w_ref[...], x_stack, preferred_element_type=jnp.float32)
    o_ref[0] = acc.astype(o_ref.dtype)   # lane-dense store: last dim = TL


def _vmem_block_bytes(tl, c_in, tco, K, halo, in_isz, out_isz):
    # Double-buffered pipeline blocks + rough size of in-kernel f32 temps.
    bufs = 2 * (c_in * tl * in_isz            # x main tile
                + c_in * halo * in_isz        # halo tile
                + tco * K * c_in * in_isz     # tap-stacked weight tile
                + tco * tl * out_isz)         # output tile
    temps = 4 * (c_in * (tl + halo)           # concatenated tile
                 + K * c_in * tl              # tap-stacked RHS
                 + tco * tl)                  # f32 accumulator
    return bufs + temps


def _pick_blocks(L, c_in, c_out, K, halo, in_isz, out_isz, max_block_l,
                 block_co=None, budget_bytes=20 * 2 ** 20):
    """Length tile (multiple of 128, >= HALO) and C_out tile fitting VMEM."""
    tl = max(128, _round_up(min(max_block_l, 2048), 128))
    tl = min(tl, _round_up(L, 128))
    tl = max(tl, halo)                      # reshape-halo needs TL >= HALO
    tl_min = max(128, halo)
    tco = c_out if block_co is None else block_co
    while _vmem_block_bytes(tl, c_in, tco, K, halo, in_isz, out_isz) > budget_bytes:
        if tl > tl_min:
            tl = max(tl_min, _round_up(tl // 2, 128))
        elif (block_co is None and tco % 16 == 0
              and c_out % (tco // 2) == 0):
            tco //= 2                       # stays a multiple of 8
        else:
            break
    return tl, tco


def causal_conv1d(x_ncl, weight, *, dilation=1, groups=1,
                  compute_dtype=None, max_block_l=1024, block_co=None):
    """Causal Conv1d matching the PyTorch CausalConv1d forward.

    x_ncl:  (B, C_in, L)                 -- PyTorch NCL layout
    weight: (C_out, C_in // groups, K)   -- PyTorch Conv1d weight, no bias
    compute_dtype: e.g. jnp.bfloat16 to feed the MXU in bf16 (f32 accumulate).
    returns (B, C_out, L) in x_ncl.dtype.
    """
    assert groups == 1, "only groups=1 implemented"
    # TODO(synk): grouped convolution (groups > 1) not implemented.
    B, C_in, L = x_ncl.shape
    C_out, C_in_w, K = weight.shape
    assert C_in_w == C_in, (C_in_w, C_in)
    pad = (K - 1) * dilation
    assert pad >= 1, "kernel_size == 1 degenerates to a pointwise matmul"
    # TODO(synk): K == 1 (pad == 0) fallback not implemented (unused by the module).

    out_dtype = jnp.dtype(x_ncl.dtype)
    cdt = jnp.dtype(compute_dtype) if compute_dtype is not None else out_dtype
    in_isz = cdt.itemsize
    out_isz = out_dtype.itemsize

    HALO = _round_up(pad, 128)                       # lane-aligned halo width
    TL, TCO = _pick_blocks(L, C_in, C_out, K, HALO, in_isz, out_isz,
                           max_block_l, block_co)
    assert C_out % TCO == 0 and (TCO == C_out or TCO % 8 == 0), (C_out, TCO)
    n_t = -(-L // TL)
    L_ceil = n_t * TL
    n_co = C_out // TCO

    x = x_ncl.astype(cdt)
    # Single left+right pad of x; x_main is a slice of it and the per-tile
    # causal halos come from a strided reshape-slice (no gather, no full
    # left-padded second copy beyond this one padded buffer).
    xp = jnp.pad(x, ((0, 0), (0, 0), (HALO, L_ceil - L)))      # (B, C_in, HALO+L_ceil)
    x_main = xp[:, :, HALO:]                                   # (B, C_in, L_ceil)
    halos = xp[:, :, :n_t * TL].reshape(B, C_in, n_t, TL)[..., :HALO]
    halos = jnp.transpose(halos, (0, 2, 1, 3))                 # (B, n_t, C_in, HALO)

    # Tap-stacked weights: w_stack[co, k*C_in + ci] = weight[co, ci, k].
    w_stack = jnp.transpose(weight, (0, 2, 1)).reshape(C_out, K * C_in).astype(cdt)

    kernel = functools.partial(_causal_conv1d_kernel,
                               K=K, dilation=dilation, pad=pad)

    est = _vmem_block_bytes(TL, C_in, TCO, K, HALO, in_isz, out_isz)
    vmem_limit = int(min(64 * 2 ** 20, max(32 * 2 ** 20, 2 * est)))

    flops = 2 * B * L_ceil * K * C_in * C_out
    bytes_accessed = int(n_co * (x_main.size + halos.size) * in_isz
                         + w_stack.size * in_isz
                         + B * C_out * L_ceil * out_isz)

    out = pl.pallas_call(
        kernel,
        out_shape=jax.ShapeDtypeStruct((B, C_out, L_ceil), out_dtype),
        grid_spec=pltpu.PrefetchScalarGridSpec(
            num_scalar_prefetch=0,
            grid=(B, n_co, n_t),
            in_specs=[
                pl.BlockSpec((1, 1, C_in, HALO), lambda b, co, l: (b, l, 0, 0)),
                pl.BlockSpec((1, C_in, TL), lambda b, co, l: (b, 0, l)),
                pl.BlockSpec((TCO, K * C_in), lambda b, co, l: (co, 0)),
            ],
            out_specs=pl.BlockSpec((1, TCO, TL), lambda b, co, l: (b, co, l)),
        ),
        compiler_params=pltpu.CompilerParams(
            dimension_semantics=("parallel", "parallel", "parallel"),
            vmem_limit_bytes=vmem_limit),
        cost_estimate=pl.CostEstimate(flops=flops, transcendentals=0,
                                      bytes_accessed=bytes_accessed),
    )(halos, x_main, w_stack)

    return out[:, :, :L] if L_ceil != L else out


def _reference(x_ncl, weight, *, dilation=1):
    """Pure-JAX reference: Conv1d with causal (left-only) padding."""
    K = weight.shape[-1]
    pad = (K - 1) * dilation
    return jax.lax.conv_general_dilated(
        x_ncl, weight,
        window_strides=(1,),
        padding=[(pad, 0)],
        rhs_dilation=(dilation,),
        dimension_numbers=("NCH", "OIH", "NCH"))


if __name__ == "__main__":
    key = jax.random.PRNGKey(0)
    kx, kw, kx2, kw2, kx3, kw3 = jax.random.split(key, 6)

    # --- Config 1: K=3, dilation=2 (ResidualLayer-style), multiple L tiles ---
    B, C_in, C_out, L = 2, 8, 16, 300
    kernel_size, dil = 3, 2
    x = jax.random.normal(kx, (B, C_in, L), dtype=jnp.float32)
    w = jax.random.normal(kw, (C_out, C_in, kernel_size), dtype=jnp.float32) * 0.1

    out = causal_conv1d(x, w, dilation=dil, groups=1, max_block_l=128)
    out = jax.block_until_ready(out)
    ref = _reference(x, w, dilation=dil)
    assert out.shape == (B, C_out, L), out.shape
    assert jnp.allclose(out, ref, atol=1e-4, rtol=1e-4), "f32 mismatch vs reference"

    # --- Config 2: K=2, dilation=1 (WaveNet input_conv-style), bf16 MXU path ---
    B2, Ci2, Co2, L2 = 2, 16, 8, 160
    x2 = jax.random.normal(kx2, (B2, Ci2, L2), dtype=jnp.float32)
    w2 = jax.random.normal(kw2, (Co2, Ci2, 2), dtype=jnp.float32) * 0.1

    out2 = causal_conv1d(x2, w2, dilation=1, groups=1,
                         compute_dtype=jnp.bfloat16)
    out2 = jax.block_until_ready(out2)
    ref2 = _reference(x2, w2, dilation=1)
    assert out2.shape == (B2, Co2, L2), out2.shape
    assert jnp.allclose(out2, ref2, atol=5e-2, rtol=5e-2), "bf16 mismatch vs reference"

    # --- Config 3: K=3, dilation=4, output-channel tiling path (TCO < C_out) ---
    B3, Ci3, Co3, L3 = 1, 32, 64, 256
    x3 = jax.random.normal(kx3, (B3, Ci3, L3), dtype=jnp.float32)
    w3 = jax.random.normal(kw3, (Co3, Ci3, 3), dtype=jnp.float32) * 0.1

    out3 = causal_conv1d(x3, w3, dilation=4, groups=1,
                         max_block_l=128, block_co=32)
    out3 = jax.block_until_ready(out3)
    ref3 = _reference(x3, w3, dilation=4)
    assert out3.shape == (B3, Co3, L3), out3.shape
    assert jnp.allclose(out3, ref3, atol=1e-4, rtol=1e-4), "C_out-tiled mismatch vs reference"

    print("KERNEL_OK")
</pallas_src>

<mosaic_0001>
module attributes {stable_mosaic.version = 11 : i64} {
  func.func @_causal_conv1d_kernel(%arg0: i32, %arg1: i32, %arg2: i32, %arg3: memref<1x1x8x128xf32, #tpu.memory_space<vmem>>, %arg4: memref<1x8x128xf32, #tpu.memory_space<vmem>>, %arg5: memref<16x24xf32, #tpu.memory_space<vmem>>, %arg6: memref<1x16x128xf32, #tpu.memory_space<vmem>>) attributes {dimension_semantics = [#tpu.dimension_semantics<parallel>, #tpu.dimension_semantics<parallel>, #tpu.dimension_semantics<parallel>], iteration_bounds = array<i64: 2, 1, 3>, scalar_prefetch = 0 : i64, scratch_operands = 0 : i64, tpu.core_type = #tpu.core_type<tc>, window_params = [{transform_indices = @transform_0, window_bounds = array<i64: 1, 1, 8, 128>}, {transform_indices = @transform_1, window_bounds = array<i64: 1, 8, 128>}, {transform_indices = @transform_2, window_bounds = array<i64: 16, 24>}, {transform_indices = @transform_3, window_bounds = array<i64: 1, 16, 128>}]} {
    %c0 = arith.constant 0 : index
    %c0_0 = arith.constant 0 : index
    %c0_1 = arith.constant 0 : index
    %c0_2 = arith.constant 0 : index
    %0 = vector.load %arg3[%c0, %c0_0, %c0_1, %c0_2] : memref<1x1x8x128xf32, #tpu.memory_space<vmem>>, vector<1x1x8x128xf32>
    %1 = vector.shape_cast %0 : vector<1x1x8x128xf32> to vector<8x128xf32>
    %c0_3 = arith.constant 0 : index
    %c0_4 = arith.constant 0 : index
    %c0_5 = arith.constant 0 : index
    %2 = vector.load %arg4[%c0_3, %c0_4, %c0_5] : memref<1x8x128xf32, #tpu.memory_space<vmem>>, vector<1x8x128xf32>
    %3 = vector.shape_cast %2 : vector<1x8x128xf32> to vector<8x128xf32>
    %4 = tpu.concatenate %1, %3 in 1 : vector<8x128xf32>, vector<8x128xf32> -> vector<8x256xf32>
    %5 = vector.extract_strided_slice %4 {offsets = [0, 124], sizes = [8, 128], strides = [1, 1]} : vector<8x256xf32> to vector<8x128xf32>
    %6 = vector.extract_strided_slice %4 {offsets = [0, 126], sizes = [8, 128], strides = [1, 1]} : vector<8x256xf32> to vector<8x128xf32>
    %7 = vector.extract_strided_slice %4 {offsets = [0, 128], sizes = [8, 128], strides = [1, 1]} : vector<8x256xf32> to vector<8x128xf32>
    %8 = tpu.concatenate %5, %6, %7 in 0 : vector<8x128xf32>, vector<8x128xf32>, vector<8x128xf32> -> vector<24x128xf32>
    %c0_6 = arith.constant 0 : index
    %c0_7 = arith.constant 0 : index
    %9 = vector.load %arg5[%c0_6, %c0_7] : memref<16x24xf32, #tpu.memory_space<vmem>>, vector<16x24xf32>
    %cst = arith.constant dense<0.000000e+00> : vector<16x128xf32>
    %10 = tpu.matmul %9, %8, %cst {dimension_numbers = #tpu.dot_dimension_numbers<[1], [0], [0], [1], [0, 0, 1, 1], [], []>} : vector<16x24xf32>, vector<24x128xf32>, vector<16x128xf32> -> vector<16x128xf32>
    %c0_8 = arith.constant 0 : index
    %c0_9 = arith.constant 0 : index
    %c0_10 = arith.constant 0 : index
    %11 = vector.load %arg6[%c0_8, %c0_9, %c0_10] : memref<1x16x128xf32, #tpu.memory_space<vmem>>, vector<1x16x128xf32>
    %12 = vector.shape_cast %11 : vector<1x16x128xf32> to vector<16x128xf32>
    %13 = vector.shape_cast %10 : vector<16x128xf32> to vector<1x16x128xf32>
    tpu.vector_store %arg6[%c0_8, %c0_9, %c0_10], %13 {strides = array<i32>} : memref<1x16x128xf32, #tpu.memory_space<vmem>>, vector<1x16x128xf32>,
    return
  }
  func.func @transform_0(%arg0: i32, %arg1: i32, %arg2: i32) -> (i32, i32, i32, i32) {
    %c0_i32 = arith.constant 0 : i32
    %c0_i32_0 = arith.constant 0 : i32
    %c0_i32_1 = arith.constant 0 : i32
    return %arg0, %arg2, %c0_i32, %c0_i32_0 : i32, i32, i32, i32
  }
  func.func @transform_1(%arg0: i32, %arg1: i32, %arg2: i32) -> (i32, i32, i32) {
    %c0_i32 = arith.constant 0 : i32
    %c0_i32_0 = arith.constant 0 : i32
    return %arg0, %c0_i32, %arg2 : i32, i32, i32
  }
  func.func @transform_2(%arg0: i32, %arg1: i32, %arg2: i32) -> (i32, i32) {
    %c0_i32 = arith.constant 0 : i32
    %c0_i32_0 = arith.constant 0 : i32
    return %arg1, %c0_i32 : i32, i32
  }
  func.func @transform_3(%arg0: i32, %arg1: i32, %arg2: i32) -> (i32, i32, i32) {
    %c0_i32 = arith.constant 0 : i32
    return %arg0, %arg1, %arg2 : i32, i32, i32
  }
}

</mosaic_0001>

<llo_original>
// kernel: tpu_custom_call.1
$region0: #{tpu_custom_call.1}
  #allocation0 [shape = 'u32[]', space=smem, size = 0x4, offset = 0x4, fixed_abs, tag = 'smem constant byte address 0x4 - core index']
  #allocation1 [shape = 'u32[144,128]{1,0:T(1,128)}', space=vmem, size = 0x12000, scoped, tag = 'internal scratch']
  %s0 = inlined_call_operand.hbm [shape: f32[2,3,8,128], index: 0, kind: input, shape index: {}]
  %s1 = inlined_call_operand.hbm [shape: f32[2,8,384], index: 1, kind: input, shape index: {}]
  %s2 = inlined_call_operand.hbm [shape: f32[16,24], index: 2, kind: input, shape index: {}]
  %s3 = inlined_call_operand.hbm [shape: f32[2,16,384], index: 3, kind: output, shape index: {}]
  %s4 = sld [smem:[#allocation0]]
  $region57: #{tpu_custom_call.1} parent=0
    _
  %s6 = ssub.s32 1, %s4
  %s7 = scalar_select 0, %s6, %s4
  $region1: #{tpu_custom_call.1} parent=0
    #allocation2 [shape = 'u8[8192]{0}', space=vmem, size = 0x2000, scoped, tag = 'input window, operand 0']
    #allocation3 [shape = 's32[2]{0}', space=sflag, size = 0x8, scoped, tag = 'scoped memory for tpu_custom_call.1']
    #allocation4 [shape = 's32[2]{0}', space=sflag, size = 0x8, scoped, tag = 'scoped memory for tpu_custom_call.1']
    #allocation5 [shape = 'u8[8192]{0}', space=vmem, size = 0x2000, scoped, tag = 'input window, operand 1']
    #allocation6 [shape = 's32[2]{0}', space=sflag, size = 0x8, scoped, tag = 'scoped memory for tpu_custom_call.1']
    #allocation7 [shape = 'u8[8192]{0}', space=vmem, size = 0x2000, scoped, tag = 'input window, operand 2, single buffered']
    #allocation8 [shape = 'u8[16384]{0}', space=vmem, size = 0x4000, scoped, tag = 'output window, operand 0']
    %8 = vsyncpa [#allocation3], 0
    %s9 = scalar_lea.sflag [#allocation3], 1
    %10 = vsyncpa %s9, 0
    %11 = vsyncpa [#allocation6], 0
    %s12 = scalar_lea.sflag [#allocation6], 1
    %13 = vsyncpa %s12, 0
    %14 = vsyncpa [#allocation4], 0
    %s15 = scalar_lea.sflag [#allocation4], 1
    %16 = vsyncpa %s15, 0
    loop: start=0, step=1, limit=8
    $region2: #{tpu_custom_call.1} parent=1 // loop_pre_header
      _
    $region3: #{tpu_custom_call.1} parent=1 // loop_header
      %s18 = sphi 0, %s22
      %p19 = scmp.ge.s32.totalorder %s18, 8
      %s25 = sphi 0, %s44
      %s26 = sphi 0, %s40
      %s27 = sphi 0, %s36
      %s28 = sphi 0, %s25
      %s29 = sphi 0, %s26
      %s30 = sphi 0, %s27
      %s31 = sphi 0, %s28
      %s32 = sphi 0, %s29
      %s33 = sphi 0, %s30
      %s49 = sphi 0, %s51
      %s52 = sphi 0, %s49
      %s53 = sphi 0, %s52
      %s69 = sphi 0, %s53
      %s77 = sphi 0, %s79
      %s80 = sphi 0, %s77
      %s81 = sphi 0, %s80
      %s97 = sphi 0, %s81
      %s103 = sphi 0, %s105
      %s106 = sphi 0, %s103
      %s107 = sphi 0, %s106
      %s123 = sphi 0, %s107
      %s133 = sphi 0, %s135
      %s136 = sphi 0, %s133
      %s137 = sphi 0, %s136
      %s153 = sphi 0, %s137
    $region4: #{tpu_custom_call.1} parent=1 // loop_header_branch
      %21 = sbr.rel (%p19) target = $region8
    $region5: #{tpu_custom_call.1} parent=1 // loop_body
      %s23 = ssub.s32 %s18, 1
      %s24 = ssub.s32 %s18, 2
      %s34 = sadd.s32 1, %s27
      %p35 = scmp.ge.s32.totalorder %s34, 3
      %s36 = scalar_select %p35, 0, %s34
      %s37 = sadd.s32 1, %s26
      %s38 = scalar_select %p35, %s37, %s26
      %p39 = scmp.ge.s32.totalorder %s38, 1
      %s40 = scalar_select %p39, 0, %s38
      %s41 = sadd.s32 1, %s25
      %s42 = scalar_select %p39, %s41, %s25
      %p43 = scmp.ge.s32.totalorder %s42, 2
      %s44 = scalar_select %p43, 0, %s42
      %s45 = ssub.s32 %s25, %s44
      %s46 = ssub.s32 %s27, %s36
      %s47 = sor.u32 %s45, %s46
      %p48 = scmp.eq.s32.totalorder %s47, 0
      %s50 = sadd.s32 %s49, 1
      %s51 = scalar_select %p48, %s49, %s50
      %p54 = pneg %p48
      %p55 = scmp.eq.s32.totalorder %s18, 5
      %p56 = por %p54, %p55
      %p57 = scmp.ne.s32.totalorder %s49, %s52
      %p58 = scmp.eq.s32.totalorder %s18, 0
      %p59 = por %p57, %p58
      %p60 = scmp.ne.s32.totalorder %s49, %s52
      %p61 = scmp.eq.s32.totalorder %s23, 5
      %p62 = por %p60, %p61
      %p63 = scmp.ne.s32.totalorder %s52, %s53
      %p64 = scmp.eq.s32.totalorder %s23, 0
      %p65 = por %p63, %p64
      %p66 = scmp.ne.s32.totalorder %s52, %s53
      %p67 = scmp.eq.s32.totalorder %s24, 5
      %p68 = por %p66, %p67
      %p70 = scmp.ne.s32.totalorder %s53, %s69
      %p71 = scmp.eq.s32.totalorder %s24, 0
      %p72 = por %p70, %p71
      %s73 = ssub.s32 %s25, %s44
      %s74 = ssub.s32 %s27, %s36
      %s75 = sor.u32 %s73, %s74
      %p76 = scmp.eq.s32.totalorder %s75, 0
      %s78 = sadd.s32 %s77, 1
      %s79 = scalar_select %p76, %s77, %s78
      %p82 = pneg %p76
      %p83 = scmp.eq.s32.totalorder %s18, 5
      %p84 = por %p82, %p83
      %p85 = scmp.ne.s32.totalorder %s77, %s80
      %p86 = scmp.eq.s32.totalorder %s18, 0
      %p87 = por %p85, %p86
      %p88 = scmp.ne.s32.totalorder %s77, %s80
      %p89 = scmp.eq.s32.totalorder %s23, 5
      %p90 = por %p88, %p89
      %p91 = scmp.ne.s32.totalorder %s80, %s81
      %p92 = scmp.eq.s32.totalorder %s23, 0
      %p93 = por %p91, %p92
      %p94 = scmp.ne.s32.totalorder %s80, %s81
      %p95 = scmp.eq.s32.totalorder %s24, 5
      %p96 = por %p94, %p95
      %p98 = scmp.ne.s32.totalorder %s81, %s97
      %p99 = scmp.eq.s32.totalorder %s24, 0
      %p100 = por %p98, %p99
      %s101 = ssub.s32 %s26, %s40
      %p102 = scmp.eq.s32.totalorder %s101, 0
      %s104 = sadd.s32 %s103, 1
      %s105 = scalar_select %p102, %s103, %s104
      %p108 = pneg %p102
      %p109 = scmp.eq.s32.totalorder %s18, 5
      %p110 = por %p108, %p109
      %p111 = scmp.ne.s32.totalorder %s103, %s106
      %p112 = scmp.eq.s32.totalorder %s18, 0
      %p113 = por %p111, %p112
      %p114 = scmp.ne.s32.totalorder %s103, %s106
      %p115 = scmp.eq.s32.totalorder %s23, 5
      %p116 = por %p114, %p115
      %p117 = scmp.ne.s32.totalorder %s106, %s107
      %p118 = scmp.eq.s32.totalorder %s23, 0
      %p119 = por %p117, %p118
      %p120 = scmp.ne.s32.totalorder %s106, %s107
      %p121 = scmp.eq.s32.totalorder %s24, 5
      %p122 = por %p120, %p121
      %p124 = scmp.ne.s32.totalorder %s107, %s123
      %p125 = scmp.eq.s32.totalorder %s24, 0
      %p126 = por %p124, %p125
      %s127 = ssub.s32 %s25, %s44
      %s128 = ssub.s32 %s26, %s40
      %s129 = sor.u32 %s127, %s128
      %s130 = ssub.s32 %s27, %s36
      %s131 = sor.u32 %s129, %s130
      %p132 = scmp.eq.s32.totalorder %s131, 0
      %s134 = sadd.s32 %s133, 1
      %s135 = scalar_select %p132, %s133, %s134
      %p138 = pneg %p132
      %p139 = scmp.eq.s32.totalorder %s18, 5
      %p140 = por %p138, %p139
      %p141 = scmp.ne.s32.totalorder %s133, %s136
      %p142 = scmp.eq.s32.totalorder %s18, 0
      %p143 = por %p141, %p142
      %p144 = scmp.ne.s32.totalorder %s133, %s136
      %p145 = scmp.eq.s32.totalorder %s23, 5
      %p146 = por %p144, %p145
      %p147 = scmp.ne.s32.totalorder %s136, %s137
      %p148 = scmp.eq.s32.totalorder %s23, 0
      %p149 = por %p147, %p148
      %p150 = scmp.ne.s32.totalorder %s136, %s137
      %p151 = scmp.eq.s32.totalorder %s24, 5
      %p152 = por %p150, %p151
      %p154 = scmp.ne.s32.totalorder %s137, %s153
      %p155 = scmp.eq.s32.totalorder %s24, 0
      %p156 = por %p154, %p155
      %p157 = scmp.le.s32.totalorder 1, %s18
      %p158 = scmp.lt.s32.totalorder %s18, 7
      %p159 = pnand %p157, %p158
      %p160 = pneg %p159
      // Predicated region
      $region9: #{tpu_custom_call.1} parent=5 // pred_check
        _
      $region10: #{tpu_custom_call.1} parent=5 // pred_check_branch
        %162 = sbr.rel (%p159) target = $region12
      $region11: #{tpu_custom_call.1} parent=5 // pred_region
        %s163 = ssub.s32 %s18, 1
        // Predicated region
        $region13: #{tpu_custom_call.1} parent=11 // pred_check
          %p164 = pneg %p119
        $region14: #{tpu_custom_call.1} parent=11 // pred_check_branch
          %166 = sbr.rel (%p164) target = $region16
        $region15: #{tpu_custom_call.1} parent=11 // pred_region
          %s167 = smul.u32 2, %s29
          %s169 = ssub.s32 256, 256
          %170 = vsyncadd [#allocation6], %s169
          %s171 = smul.addr %s167, 128
          %s172 = scalar_lea.hbm %s2, %s171
          %s173 = sshll.u32 [#allocation7], 4
          %s174 = int_to_ptr.vmem [resolvable:$true] %s173
          %179 = dma.hbm_to_vmem [thread:$0]  %s172, 256, %s174, [#allocation6], 128, 128, 8
        $region16: #{tpu_custom_call.1} parent=11 // pred_fallthru
          _
      $region12: #{tpu_custom_call.1} parent=5 // pred_fallthru
        _
      %p180 = scmp.lt.s32.totalorder %s18, 6
      // Predicated region
      $region17: #{tpu_custom_call.1} parent=5 // pred_check
        %p181 = pneg %p180
      $region18: #{tpu_custom_call.1} parent=5 // pred_check_branch
        %183 = sbr.rel (%p181) target = $region20
      $region19: #{tpu_custom_call.1} parent=5 // pred_region
        // Predicated region
        $region21: #{tpu_custom_call.1} parent=19 // pred_check
          %p184 = pneg %p59
        $region22: #{tpu_custom_call.1} parent=19 // pred_check_branch
          %186 = sbr.rel (%p184) target = $region24
        $region23: #{tpu_custom_call.1} parent=19 // pred_region
          %s187 = sand.u32 %s49, 1
          %s188 = scalar_lea.sflag [#allocation3], %s187
          %s189 = sand.u32 %s49, 1
          %s190 = smul.addr %s189, 8
          %s191 = scalar_lea.vmem [#allocation2], %s190
          %s193 = ssub.s32 128, 128
          %194 = vsyncadd %s188, %s193
          %s195 = smul.addr %s25, 3
          %s196 = sadd.s32 %s27, %s195
          %s197 = smul.addr %s196, 128
          %s198 = scalar_lea.hbm %s0, %s197
          %s200 = sshll.u32 %s191, 4
          %s201 = int_to_ptr.vmem [resolvable:$true] %s200
          %203 = dma.hbm_to_vmem [thread:$0]  %s198, 128, %s201, %s188
        $region24: #{tpu_custom_call.1} parent=19 // pred_fallthru
          _
        // Predicated region
        $region25: #{tpu_custom_call.1} parent=19 // pred_check
          %p204 = pneg %p87
        $region26: #{tpu_custom_call.1} parent=19 // pred_check_branch
          %206 = sbr.rel (%p204) target = $region28
        $region27: #{tpu_custom_call.1} parent=19 // pred_region
          %s207 = sand.u32 %s18, 1
          %s208 = scalar_lea.sflag [#allocation6], %s207
          %s209 = sand.u32 %s77, 1
          %s210 = smul.addr %s209, 8
          %s211 = scalar_lea.vmem [#allocation5], %s210
          %s213 = ssub.s32 128, 128
          %214 = vsyncadd %s208, %s213
          %s215 = smul.addr %s25, 3
          %s216 = sadd.s32 %s27, %s215
          %s217 = smul.addr %s216, 128
          %s218 = scalar_lea.hbm %s1, %s217
          %s220 = sshll.u32 %s211, 4
          %s221 = int_to_ptr.vmem [resolvable:$true] %s220
          %223 = dma.hbm_to_vmem [thread:$0]  %s218, 128, %s221, %s208
        $region28: #{tpu_custom_call.1} parent=19 // pred_fallthru
          _
      $region20: #{tpu_custom_call.1} parent=5 // pred_fallthru
        _
      %p224 = scmp.le.s32.totalorder 1, %s18
      %p225 = scmp.lt.s32.totalorder %s18, 7
      %p226 = pnand %p224, %p225
      %p227 = pneg %p226
      // Predicated region
      $region29: #{tpu_custom_call.1} parent=5 // pred_check
        _
      $region30: #{tpu_custom_call.1} parent=5 // pred_check_branch
        %229 = sbr.rel (%p226) target = $region32
      $region31: #{tpu_custom_call.1} parent=5 // pred_region
        %s230 = ssub.s32 %s18, 1
        %s231 = sand.u32 %s52, 1
        %s232 = scalar_lea.sflag [#allocation3], %s231
        %s233 = sand.u32 %s52, 1
        %s234 = smul.addr %s233, 8
        %s235 = scalar_lea.vmem [#allocation2], %s234
        // Predicated region
        $region33: #{tpu_custom_call.1} parent=31 // pred_check
          %p236 = pneg %p65
        $region34: #{tpu_custom_call.1} parent=31 // pred_check_branch
          %238 = sbr.rel (%p236) target = $region36
        $region35: #{tpu_custom_call.1} parent=31 // pred_region
          %239 = dma.done %s232, 128
        $region36: #{tpu_custom_call.1} parent=31 // pred_fallthru
          _
        %s240 = sand.u32 %s23, 1
        %s241 = scalar_lea.sflag [#allocation6], %s240
        %s242 = sand.u32 %s80, 1
        %s243 = smul.addr %s242, 8
        %s244 = scalar_lea.vmem [#allocation5], %s243
        // Predicated region
        $region37: #{tpu_custom_call.1} parent=31 // pred_check
          %p245 = pneg %p93
        $region38: #{tpu_custom_call.1} parent=31 // pred_check_branch
          %247 = sbr.rel (%p245) target = $region40
        $region39: #{tpu_custom_call.1} parent=31 // pred_region
          %248 = dma.done %s241, 128
        $region40: #{tpu_custom_call.1} parent=31 // pred_fallthru
          _
        // Predicated region
        $region41: #{tpu_custom_call.1} parent=31 // pred_check
          %p249 = pneg %p119
        $region42: #{tpu_custom_call.1} parent=31 // pred_check_branch
          %251 = sbr.rel (%p249) target = $region44
        $region43: #{tpu_custom_call.1} parent=31 // pred_region
          %252 = dma.done [#allocation6], 256
        $region44: #{tpu_custom_call.1} parent=31 // pred_fallthru
          _
        %s253 = sand.u32 %s52, 1
        %s254 = scalar_lea.sflag [#allocation3], %s253
        %s255 = sand.u32 %s52, 1
        %s256 = smul.addr %s255, 8
        %s257 = scalar_lea.vmem [#allocation2], %s256
        %p258 = pneg %p65
        %p259 = pneg %p62
        %s260 = sand.u32 %s23, 1
        %s261 = scalar_lea.sflag [#allocation6], %s260
        %s262 = sand.u32 %s80, 1
        %s263 = smul.addr %s262, 8
        %s264 = scalar_lea.vmem [#allocation5], %s263
        %p265 = pneg %p93
        %p266 = pneg %p90
        %p267 = pneg %p119
        %p268 = pneg %p116
        %p269 = pneg %p149
        %p270 = pneg %p146
        %s271 = sand.u32 %s136, 1
        %s272 = scalar_lea.sflag [#allocation4], %s271
        %s273 = sand.u32 %s136, 1
        %s274 = smul.addr %s273, 16
        %s275 = scalar_lea.vmem [#allocation8], %s274
        %s276 = smul.u32 2, %s29
        %s277 = smul.u32 2, %s29
        %v278 = vld [vmem:[%s235] sm:$0xff]
        %v279 = vld [vmem:[%s244] sm:$0xff]
        %282 = vrot.lane.b32.xlu0 %v278, 126
        %v283 = vpop.permute.xlu0 %282
        %284 = vrot.lane.b32.xlu0 %v279, 126
        %v285 = vpop.permute.xlu0 %284
        %vm286 = vcmask 1031168
        %v287 = vsel %vm286, %v283, %v285
        %288 = vrot.lane.b32.xlu0 %v279, 124
        %v289 = vpop.permute.xlu0 %288
        %v290 = vld [vmem:[#allocation7] sm:$0xff]
        %v291 = vld [vmem:[#allocation7 + $0x8] sm:$0xff]
        %292 = vrot.lane.b32.xlu0 %v278, 4
        %v293 = vpop.permute.xlu0 %292
        %294 = vrot.lane.b32.xlu0 %v279, 4
        %v295 = vpop.permute.xlu0 %294
        %296 = vrot.lane.b32.xlu0 %v287, 4
        %v297 = vpop.permute.xlu0 %296
        %298 = vrot.lane.b32.xlu0 %v285, 4
        %v299 = vpop.permute.xlu0 %298
        %300 = vrot.lane.b32.xlu0 %v289, 4
        %v301 = vpop.permute.xlu0 %300
        %vm302 = vcmask 31744
        %v303 = vsel %vm302, %v293, %v295
        %v304 = vsel %vm302, %v297, %v299
        %vm308 = vcmask 195584
        %v310 = vsel %vm308, %v290, 0
        %v313 = vsel %vm308, %v291, 0
        %315 = vmatprep.subr.mxu0 0.0
        %316 = vmatpush1.msra.mxu0 0.0
        %317 = vmatprep.subr.mxu0 0.0
        %318 = vmatpush1.msra.mxu0 0.0
        %319 = vmatprep.subr.mxu0 0.0
        %320 = vmatpush1.msra.mxu0 0.0
        %321 = vmatprep.subr.mxu0 0.0
        %322 = vmatpush1.msra.mxu0 0.0
        %323 = vmatprep.subr.mxu0 0.0
        %324 = vmatpush1.msra.mxu0 0.0
        %325 = vmatprep.subr.mxu0 0.0
        %326 = vmatpush1.msra.mxu0 0.0
        %327 = vmatprep.subr.mxu0 0.0
        %328 = vmatpush1.msra.mxu0 0.0
        %329 = vmatprep.subr.mxu0 0.0
        %330 = vmatpush1.msra.mxu0 0.0
        %331 = vmatprep.subr.mxu0 0.0
        %332 = vmatpush1.msra.mxu0 0.0
        %333 = vmatprep.subr.mxu0 0.0
        %334 = vmatpush1.msra.mxu0 0.0
        %335 = vmatprep.subr.mxu0 0.0
        %336 = vmatpush1.msra.mxu0 0.0
        %337 = vmatprep.subr.mxu0 0.0
        %338 = vmatpush1.msra.mxu0 0.0
        %339 = vmatprep.subr.mxu0 0.0
        %340 = vmatpush1.msra.mxu0 0.0
        %341 = vmatprep.subr.mxu0 0.0
        %342 = vmatpush1.msra.mxu0 %v301
        %343 = vmatprep.subr.mxu0 0.0
        %344 = vmatpush1.msra.mxu0 %v304
        %345 = vmatprep.subr.mxu0 0.0
        %346 = vmatpush1.msra.mxu0 %v303
        %347 = vmatprep.subr.mxu0 0.0
        %348 = vmatpush2.msra.mxu0 0.0
        %349 = vmatprep.subr.mxu0 0.0
        %350 = vmatpush2.msra.mxu0 0.0
        %351 = vmatprep.subr.mxu0 0.0
        %352 = vmatpush2.msra.mxu0 0.0
        %353 = vmatprep.subr.mxu0 0.0
        %354 = vmatpush2.msra.mxu0 0.0
        %355 = vmatprep.subr.mxu0 0.0
        %356 = vmatpush2.msra.mxu0 0.0
        %357 = vmatprep.subr.mxu0 0.0
        %358 = vmatpush2.msra.mxu0 0.0
        %359 = vmatprep.subr.mxu0 0.0
        %360 = vmatpush2.msra.mxu0 0.0
        %361 = vmatprep.subr.mxu0 0.0
        %362 = vmatpush2.msra.mxu0 0.0
        %363 = vmatprep.subr.mxu0 0.0
        %364 = vmatpush2.msra.mxu0 0.0
        %365 = vmatprep.subr.mxu0 0.0
        %366 = vmatpush2.msra.mxu0 0.0
        %367 = vmatprep.subr.mxu0 0.0
        %368 = vmatpush2.msra.mxu0 0.0
        %369 = vmatprep.subr.mxu0 0.0
        %370 = vmatpush2.msra.mxu0 0.0
        %371 = vmatprep.subr.mxu0 0.0
        %372 = vmatpush2.msra.mxu0 0.0
        %373 = vmatprep.subr.mxu0 0.0
        %374 = vmatpush2.msra.mxu0 0.0
        %375 = vmatprep.subr.mxu0 0.0
        %376 = vmatpush2.msra.mxu0 0.0
        %377 = vmatprep.subr.mxu0 0.0
        %378 = vmatpush2.msra.mxu0 0.0
        %379 = vmatprep.mubr.f32.mxu0 0.0
        %380 = vmatmul.mubr.f32.gmra.mxu0 %v310
        %v381 = vpop.f32.mrf.mxu0
        %v382 = vadd.f32 0.0, %v381
        %v383 = vpop.f32.mrf.mxu0
        %384 = vmatprep.mubr.f32.mxu0 0.0
        %385 = vmatmul.mubr.f32.gmra.mxu0 %v313
        %v386 = vpop.f32.mrf.mxu0
        %v387 = vadd.f32 0.0, %v386
        %v388 = vpop.f32.mrf.mxu0
        %389 = vdwg.mxu0
        %390 = vst [vmem:[%s275] sm:$0xff] %v382
        %391 = vst [vmem:[%s275 + $0x8] sm:$0xff] %v387
        %s392 = sand.u32 %s136, 1
        %s393 = scalar_lea.sflag [#allocation4], %s392
        %s394 = sand.u32 %s136, 1
        %s395 = smul.addr %s394, 16
        %s396 = scalar_lea.vmem [#allocation8], %s395
        // Predicated region
        $region45: #{tpu_custom_call.1} parent=31 // pred_check
          %p397 = pneg %p146
        $region46: #{tpu_custom_call.1} parent=31 // pred_check_branch
          %399 = sbr.rel (%p397) target = $region48
        $region47: #{tpu_custom_call.1} parent=31 // pred_region
          %s400 = smul.u32 2, %s29
          %s402 = ssub.s32 256, 256
          %403 = vsyncadd %s393, %s402
          %s404 = smul.addr %s400, 3
          %s405 = sadd.s32 %s30, %s404
          %s406 = smul.addr %s28, 6
          %s407 = sadd.s32 %s405, %s406
          %s408 = smul.addr %s407, 128
          %s409 = scalar_lea.hbm %s3, %s408
          %s410 = sshll.u32 %s396, 4
          %s411 = int_to_ptr.vmem [resolvable:$true] %s410
          %416 = dma.vmem_to_hbm [thread:$0]  %s411, 256, %s409, %s393, 128, 384, 8
        $region48: #{tpu_custom_call.1} parent=31 // pred_fallthru
          _
      $region32: #{tpu_custom_call.1} parent=5 // pred_fallthru
        _
      %p417 = scmp.le.s32.totalorder 2, %s18
      // Predicated region
      $region49: #{tpu_custom_call.1} parent=5 // pred_check
        %p418 = pneg %p417
      $region50: #{tpu_custom_call.1} parent=5 // pred_check_branch
        %420 = sbr.rel (%p418) target = $region52
      $region51: #{tpu_custom_call.1} parent=5 // pred_region
        %s421 = ssub.s32 %s18, 2
        // Predicated region
        $region53: #{tpu_custom_call.1} parent=51 // pred_check
          %p422 = pneg %p152
        $region54: #{tpu_custom_call.1} parent=51 // pred_check_branch
          %424 = sbr.rel (%p422) target = $region56
        $region55: #{tpu_custom_call.1} parent=51 // pred_region
          %s425 = sand.u32 %s137, 1
          %s426 = scalar_lea.sflag [#allocation4], %s425
          %s427 = sand.u32 %s137, 1
          %s428 = smul.addr %s427, 16
          %s429 = scalar_lea.vmem [#allocation8], %s428
          %430 = dma.done %s426, 256
        $region56: #{tpu_custom_call.1} parent=51 // pred_fallthru
          _
      $region52: #{tpu_custom_call.1} parent=5 // pred_fallthru
        _
    $region6: #{tpu_custom_call.1} parent=1 // loop_footer
      %s22 = sadd.s32 1, %s18
    $region7: #{tpu_custom_call.1} parent=1 // loop_footer_branch
      %17 = sbr.rel target = $region3
    $region8: #{tpu_custom_call.1} parent=1 // loop_exit
      _
    %431 = vsyncpa [#allocation3], 1
    %s432 = scalar_lea.sflag [#allocation3], 1
    %433 = vsyncpa %s432, 1
    %434 = vsyncpa [#allocation6], 1
    %s435 = scalar_lea.sflag [#allocation6], 1
    %436 = vsyncpa %s435, 1
    %437 = vsyncpa [#allocation4], 1
    %s438 = scalar_lea.sflag [#allocation4], 1
    %439 = vsyncpa %s438, 1

</llo_original>
